<compile_context>
chip_gen: v7x
topology: tpu7x:2x2x1
jax: 0.10.0
libtpu: 0.0.40
codegen_flags: <defaults>
</compile_context>

<pallas_src>
import functools

import jax
import jax.numpy as jnp
from jax.experimental import pallas as pl
from jax.experimental.pallas import tpu as pltpu

EPS = 1e-5


def _bottleneck_kernel(x_ref, w1_ref, b1_ref, w2_ref, b2_ref, w3_ref, b3_ref,
                       mask_ref, o_ref, *, nb, height, width, compute_dtype):
    """One grid step: NB images, channels on sublanes, NB*H*W pixels on lanes."""
    hw = height * width
    total = nb * hw

    # ---- gather the NB images into one (Cin, NB*H*W) matrix (lane concat) ----
    imgs = [x_ref[b] for b in range(nb)]               # each (Cin, HW), f32
    x_flat = imgs[0] if nb == 1 else jnp.concatenate(imgs, axis=-1)
    xc = x_flat.astype(compute_dtype)

    # ---- conv1 (1x1, BN1 folded) + ReLU ----
    h1 = jnp.dot(w1_ref[...], xc, preferred_element_type=jnp.float32)  # (Cwp, L)
    h1 = jnp.maximum(h1 + b1_ref[...], 0.0)

    # ---- conv2 (3x3, stride 1, pad 1) as a single im2col matmul ----
    # patches[(ky*3+kx)*Cwp + ci, p] = h1[ci, pixel p shifted by (ky-1, kx-1)]
    parts = []
    for ky in range(3):
        for kx in range(3):
            dy, dx = ky - 1, kx - 1
            off = dy * width + dx
            if off == 0:
                parts.append(h1)
            else:
                rolled = pltpu.roll(h1, (-off) % total, axis=1)   # XLU lane rotate
                parts.append(rolled * mask_ref[ky * 3 + kx])      # zero the borders
    patches = jnp.concatenate(parts, axis=0).astype(compute_dtype)  # (9*Cwp, L)
    h2 = jnp.dot(w2_ref[...], patches, preferred_element_type=jnp.float32)
    h2 = jnp.maximum(h2 + b2_ref[...], 0.0)

    # ---- conv3 (1x1, BN3 folded) ----
    h3 = jnp.dot(w3_ref[...], h2.astype(compute_dtype),
                 preferred_element_type=jnp.float32)              # (Cout, L)
    h3 = h3 + b3_ref[...]

    # ---- identity residual + final ReLU (f32) ----
    out = jnp.maximum(h3 + x_flat, 0.0)

    # ---- lane-dense per-image writeback ----
    for b in range(nb):
        o_ref[b] = out[:, b * hw:(b + 1) * hw]


def bottleneck_forward(x_nchw, params, *, nb=1, compute_dtype=jnp.float32):
    """x_nchw: (N, Cin, H, W) float32 — PyTorch calling convention."""
    N, Cin, H, W = x_nchw.shape
    HW = H * W
    assert N % nb == 0, "nb must divide the batch size"

    w1 = params['w1'][:, :, 0, 0]          # (Cw, Cin)
    w2 = params['w2']                      # (Cw, Cw, 3, 3)
    w3 = params['w3'][:, :, 0, 0]          # (Cout, Cw)
    Cw = w1.shape[0]
    Cout = w3.shape[0]
    assert Cin == Cout, "identity residual needs inplanes == planes*expansion"

    def bn_scale_bias(g, be, m, v):
        s = g / jnp.sqrt(v + EPS)
        return s, be - m * s

    s1, b1 = bn_scale_bias(params['g1'], params['be1'], params['m1'], params['v1'])
    s2, b2 = bn_scale_bias(params['g2'], params['be2'], params['m2'], params['v2'])
    s3, b3 = bn_scale_bias(params['g3'], params['be3'], params['m3'], params['v3'])

    # Pad the bottleneck width to a multiple of 8 sublanes; extra channels get
    # zero weights and zero bias, so they stay exactly zero through the block.
    Cwp = ((Cw + 7) // 8) * 8
    pad_w = Cwp - Cw

    # conv1: fold BN1 scale into rows, pad output channels.
    w1f = jnp.pad(w1 * s1[:, None], ((0, pad_w), (0, 0)))             # (Cwp, Cin)
    b1f = jnp.pad(b1, (0, pad_w))[:, None]                            # (Cwp, 1)

    # conv2: fold BN2 scale, reorder to (out, ky, kx, in), pad both channel dims,
    # flatten to (Cwp, 9*Cwp) matching the im2col row order (ky*3+kx)*Cwp + ci.
    w2t = jnp.transpose(w2 * s2[:, None, None, None], (0, 2, 3, 1))   # (Cw,3,3,Cw)
    w2t = jnp.pad(w2t, ((0, pad_w), (0, 0), (0, 0), (0, pad_w)))
    w2f = w2t.reshape(Cwp, 9 * Cwp)
    b2f = jnp.pad(b2, (0, pad_w))[:, None]                            # (Cwp, 1)

    # conv3: fold BN3 scale into rows, pad input channels.
    w3f = jnp.pad(w3 * s3[:, None], ((0, 0), (0, pad_w)))             # (Cout, Cwp)
    b3f = b3[:, None]                                                 # (Cout, 1)

    w1f = w1f.astype(compute_dtype)
    w2f = w2f.astype(compute_dtype)
    w3f = w3f.astype(compute_dtype)

    # Border masks for the 9 taps of the 3x3 conv, over the flattened
    # (NB images x H x W) lane axis. Image boundaries are masked, so lane
    # rotations can never leak pixels between images.
    L = nb * HW
    pos = jnp.arange(L) % HW
    hh = pos // W
    ww = pos % W
    mask_list = []
    for ky in range(3):
        for kx in range(3):
            dy, dx = ky - 1, kx - 1
            valid = ((hh + dy >= 0) & (hh + dy < H) &
                     (ww + dx >= 0) & (ww + dx < W))
            mask_list.append(valid)
    masks = jnp.stack(mask_list, 0).astype(jnp.float32).reshape(9, 1, L)

    x3 = x_nchw.reshape(N, Cin, HW)      # free reshape (contiguous dims)

    flops = 2 * N * HW * (Cin * Cwp + 9 * Cwp * Cwp + Cwp * Cout)
    bytes_accessed = (x3.size + N * Cout * HW) * 4 + sum(
        int(a.size) * a.dtype.itemsize
        for a in (w1f, b1f, w2f, b2f, w3f, b3f, masks))

    kernel = functools.partial(_bottleneck_kernel, nb=nb, height=H, width=W,
                               compute_dtype=compute_dtype)

    out3 = pl.pallas_call(
        kernel,
        out_shape=jax.ShapeDtypeStruct((N, Cout, HW), jnp.float32),
        grid_spec=pltpu.PrefetchScalarGridSpec(
            num_scalar_prefetch=0,
            grid=(N // nb,),
            in_specs=[
                pl.BlockSpec((nb, Cin, HW), lambda n: (n, 0, 0)),
                pl.BlockSpec((Cwp, Cin), lambda n: (0, 0)),
                pl.BlockSpec((Cwp, 1), lambda n: (0, 0)),
                pl.BlockSpec((Cwp, 9 * Cwp), lambda n: (0, 0)),
                pl.BlockSpec((Cwp, 1), lambda n: (0, 0)),
                pl.BlockSpec((Cout, Cwp), lambda n: (0, 0)),
                pl.BlockSpec((Cout, 1), lambda n: (0, 0)),
                pl.BlockSpec((9, 1, L), lambda n: (0, 0, 0)),
            ],
            out_specs=pl.BlockSpec((nb, Cout, HW), lambda n: (n, 0, 0)),
        ),
        compiler_params=pltpu.CompilerParams(
            dimension_semantics=("parallel",)),   # batch axis: shard across TCs on v7x
        cost_estimate=pl.CostEstimate(flops=flops, transcendentals=0,
                                      bytes_accessed=bytes_accessed),
    )(x3, w1f, b1f, w2f, b2f, w3f, b3f, masks)

    return out3.reshape(N, Cout, H, W)


def reference_forward(x, p):
    """Pure-JAX NCHW reference mirroring the PyTorch module (eval-mode BN)."""
    def bn(y, g, b, m, v):
        return (g[None, :, None, None] * (y - m[None, :, None, None])
                / jnp.sqrt(v[None, :, None, None] + EPS)
                + b[None, :, None, None])

    def conv(y, w, pad):
        return jax.lax.conv_general_dilated(
            y, w, (1, 1), pad, dimension_numbers=('NCHW', 'OIHW', 'NCHW'),
            precision=jax.lax.Precision.HIGHEST)

    out = conv(x, p['w1'], 'VALID')
    out = jnp.maximum(bn(out, p['g1'], p['be1'], p['m1'], p['v1']), 0.0)
    out = conv(out, p['w2'], ((1, 1), (1, 1)))
    out = jnp.maximum(bn(out, p['g2'], p['be2'], p['m2'], p['v2']), 0.0)
    out = conv(out, p['w3'], 'VALID')
    out = bn(out, p['g3'], p['be3'], p['m3'], p['v3'])
    return jnp.maximum(out + x, 0.0)


if __name__ == "__main__":
    # planes=4, expansion=4 -> inplanes=16 (identity add valid, downsample=None),
    # width = int(4*(64/64))*1 = 4, stride=1. Spatial 16x16, batch 4.
    N, planes, H, W = 4, 4, 16, 16
    inplanes = planes * 4          # 16
    width = planes                 # 4
    cout = planes * 4              # 16

    key = jax.random.PRNGKey(0)
    ks = jax.random.split(key, 16)

    params = {
        'w1': jax.random.normal(ks[0], (width, inplanes, 1, 1), jnp.float32) * 0.1,
        'w2': jax.random.normal(ks[1], (width, width, 3, 3), jnp.float32) * 0.1,
        'w3': jax.random.normal(ks[2], (cout, width, 1, 1), jnp.float32) * 0.1,
        'g1': 1.0 + 0.1 * jax.random.normal(ks[3], (width,), jnp.float32),
        'be1': 0.1 * jax.random.normal(ks[4], (width,), jnp.float32),
        'm1': 0.1 * jax.random.normal(ks[5], (width,), jnp.float32),
        'v1': 1.0 + 0.1 * jax.random.uniform(ks[6], (width,), jnp.float32),
        'g2': 1.0 + 0.1 * jax.random.normal(ks[7], (width,), jnp.float32),
        'be2': 0.1 * jax.random.normal(ks[8], (width,), jnp.float32),
        'm2': 0.1 * jax.random.normal(ks[9], (width,), jnp.float32),
        'v2': 1.0 + 0.1 * jax.random.uniform(ks[10], (width,), jnp.float32),
        'g3': 1.0 + 0.1 * jax.random.normal(ks[11], (cout,), jnp.float32),
        'be3': 0.1 * jax.random.normal(ks[12], (cout,), jnp.float32),
        'm3': 0.1 * jax.random.normal(ks[13], (cout,), jnp.float32),
        'v3': 1.0 + 0.1 * jax.random.uniform(ks[14], (cout,), jnp.float32),
    }

    x = jax.random.normal(ks[15], (N, inplanes, H, W), jnp.float32)

    ref = jax.block_until_ready(reference_forward(x, params))

    # f32 matmul path — tight check.
    out_f32 = jax.block_until_ready(
        bottleneck_forward(x, params, nb=2, compute_dtype=jnp.float32))
    assert out_f32.shape == ref.shape == (N, cout, H, W)
    err_f32 = float(jnp.max(jnp.abs(out_f32 - ref)))
    assert err_f32 < 1e-2, f"f32 path max abs err = {err_f32}"

    # bf16 matmul path (MXU-native) — looser check.
    out_bf16 = jax.block_until_ready(
        bottleneck_forward(x, params, nb=2, compute_dtype=jnp.bfloat16))
    err_bf16 = float(jnp.max(jnp.abs(out_bf16 - ref)))
    assert err_bf16 < 5e-2, f"bf16 path max abs err = {err_bf16}"

    print("KERNEL_OK")
</pallas_src>

<mosaic_0001>
module attributes {stable_mosaic.version = 11 : i64} {
  func.func @_bottleneck_kernel(%arg0: i32, %arg1: memref<2x16x256xf32, #tpu.memory_space<vmem>>, %arg2: memref<8x16xf32, #tpu.memory_space<vmem>>, %arg3: memref<8x1xf32, #tpu.memory_space<vmem>>, %arg4: memref<8x72xf32, #tpu.memory_space<vmem>>, %arg5: memref<8x1xf32, #tpu.memory_space<vmem>>, %arg6: memref<16x8xf32, #tpu.memory_space<vmem>>, %arg7: memref<16x1xf32, #tpu.memory_space<vmem>>, %arg8: memref<9x1x512xf32, #tpu.memory_space<vmem>>, %arg9: memref<2x16x256xf32, #tpu.memory_space<vmem>>) attributes {dimension_semantics = [#tpu.dimension_semantics<parallel>], iteration_bounds = array<i64: 2>, scalar_prefetch = 0 : i64, scratch_operands = 0 : i64, tpu.core_type = #tpu.core_type<tc>, window_params = [{transform_indices = @transform_0, window_bounds = array<i64: 2, 16, 256>}, {pipeline_mode = #tpu.pipeline_mode<synchronous>, transform_indices = @transform_1, window_bounds = array<i64: 8, 16>}, {pipeline_mode = #tpu.pipeline_mode<synchronous>, transform_indices = @transform_2, window_bounds = array<i64: 8, 1>}, {pipeline_mode = #tpu.pipeline_mode<synchronous>, transform_indices = @transform_3, window_bounds = array<i64: 8, 72>}, {pipeline_mode = #tpu.pipeline_mode<synchronous>, transform_indices = @transform_4, window_bounds = array<i64: 8, 1>}, {pipeline_mode = #tpu.pipeline_mode<synchronous>, transform_indices = @transform_5, window_bounds = array<i64: 16, 8>}, {pipeline_mode = #tpu.pipeline_mode<synchronous>, transform_indices = @transform_6, window_bounds = array<i64: 16, 1>}, {pipeline_mode = #tpu.pipeline_mode<synchronous>, transform_indices = @transform_7, window_bounds = array<i64: 9, 1, 512>}, {transform_indices = @transform_8, window_bounds = array<i64: 2, 16, 256>}]} {
    %c0 = arith.constant 0 : index
    %c0_0 = arith.constant 0 : index
    %c0_1 = arith.constant 0 : index
    %0 = vector.load %arg1[%c0, %c0_0, %c0_1] : memref<2x16x256xf32, #tpu.memory_space<vmem>>, vector<1x16x256xf32>
    %1 = vector.shape_cast %0 : vector<1x16x256xf32> to vector<16x256xf32>
    %c1 = arith.constant 1 : index
    %c0_2 = arith.constant 0 : index
    %c0_3 = arith.constant 0 : index
    %2 = vector.load %arg1[%c1, %c0_2, %c0_3] : memref<2x16x256xf32, #tpu.memory_space<vmem>>, vector<1x16x256xf32>
    %3 = vector.shape_cast %2 : vector<1x16x256xf32> to vector<16x256xf32>
    %4 = tpu.concatenate %1, %3 in 1 : vector<16x256xf32>, vector<16x256xf32> -> vector<16x512xf32>
    %c0_4 = arith.constant 0 : index
    %c0_5 = arith.constant 0 : index
    %5 = vector.load %arg2[%c0_4, %c0_5] : memref<8x16xf32, #tpu.memory_space<vmem>>, vector<8x16xf32>
    %cst = arith.constant dense<0.000000e+00> : vector<8x512xf32>
    %6 = tpu.matmul %5, %4, %cst {dimension_numbers = #tpu.dot_dimension_numbers<[1], [0], [0], [1], [0, 0, 1, 1], [], []>} : vector<8x16xf32>, vector<16x512xf32>, vector<8x512xf32> -> vector<8x512xf32>
    %c0_6 = arith.constant 0 : index
    %c0_7 = arith.constant 0 : index
    %7 = vector.load %arg3[%c0_6, %c0_7] : memref<8x1xf32, #tpu.memory_space<vmem>>, vector<8x1xf32>
    %8 = vector.broadcast %7 : vector<8x1xf32> to vector<8x512xf32>
    %9 = arith.addf %6, %8 : vector<8x512xf32>
    %cst_8 = arith.constant 0.000000e+00 : f32
    %10 = vector.broadcast %cst_8 : f32 to vector<8x512xf32>
    %11 = arith.maximumf %9, %10 : vector<8x512xf32>
    %c17_i32 = arith.constant 17 : i32
    %12 = tpu.dynamic_rotate %11 by %c17_i32 dim 1 : vector<8x512xf32>, i32 -> vector<8x512xf32>
    %c0_9 = arith.constant 0 : index
    %c0_10 = arith.constant 0 : index
    %c0_11 = arith.constant 0 : index
    %13 = vector.load %arg8[%c0_9, %c0_10, %c0_11] : memref<9x1x512xf32, #tpu.memory_space<vmem>>, vector<1x1x512xf32>
    %14 = vector.shape_cast %13 : vector<1x1x512xf32> to vector<1x512xf32>
    %15 = vector.broadcast %14 : vector<1x512xf32> to vector<8x512xf32>
    %16 = arith.mulf %12, %15 : vector<8x512xf32>
    %c16_i32 = arith.constant 16 : i32
    %17 = tpu.dynamic_rotate %11 by %c16_i32 dim 1 : vector<8x512xf32>, i32 -> vector<8x512xf32>
    %c1_12 = arith.constant 1 : index
    %c0_13 = arith.constant 0 : index
    %c0_14 = arith.constant 0 : index
    %18 = vector.load %arg8[%c1_12, %c0_13, %c0_14] : memref<9x1x512xf32, #tpu.memory_space<vmem>>, vector<1x1x512xf32>
    %19 = vector.shape_cast %18 : vector<1x1x512xf32> to vector<1x512xf32>
    %20 = vector.broadcast %19 : vector<1x512xf32> to vector<8x512xf32>
    %21 = arith.mulf %17, %20 : vector<8x512xf32>
    %c15_i32 = arith.constant 15 : i32
    %22 = tpu.dynamic_rotate %11 by %c15_i32 dim 1 : vector<8x512xf32>, i32 -> vector<8x512xf32>
    %c2 = arith.constant 2 : index
    %c0_15 = arith.constant 0 : index
    %c0_16 = arith.constant 0 : index
    %23 = vector.load %arg8[%c2, %c0_15, %c0_16] : memref<9x1x512xf32, #tpu.memory_space<vmem>>, vector<1x1x512xf32>
    %24 = vector.shape_cast %23 : vector<1x1x512xf32> to vector<1x512xf32>
    %25 = vector.broadcast %24 : vector<1x512xf32> to vector<8x512xf32>
    %26 = arith.mulf %22, %25 : vector<8x512xf32>
    %c1_i32 = arith.constant 1 : i32
    %27 = tpu.dynamic_rotate %11 by %c1_i32 dim 1 : vector<8x512xf32>, i32 -> vector<8x512xf32>
    %c3 = arith.constant 3 : index
    %c0_17 = arith.constant 0 : index
    %c0_18 = arith.constant 0 : index
    %28 = vector.load %arg8[%c3, %c0_17, %c0_18] : memref<9x1x512xf32, #tpu.memory_space<vmem>>, vector<1x1x512xf32>
    %29 = vector.shape_cast %28 : vector<1x1x512xf32> to vector<1x512xf32>
    %30 = vector.broadcast %29 : vector<1x512xf32> to vector<8x512xf32>
    %31 = arith.mulf %27, %30 : vector<8x512xf32>
    %c511_i32 = arith.constant 511 : i32
    %32 = tpu.dynamic_rotate %11 by %c511_i32 dim 1 : vector<8x512xf32>, i32 -> vector<8x512xf32>
    %c5 = arith.constant 5 : index
    %c0_19 = arith.constant 0 : index
    %c0_20 = arith.constant 0 : index
    %33 = vector.load %arg8[%c5, %c0_19, %c0_20] : memref<9x1x512xf32, #tpu.memory_space<vmem>>, vector<1x1x512xf32>
    %34 = vector.shape_cast %33 : vector<1x1x512xf32> to vector<1x512xf32>
    %35 = vector.broadcast %34 : vector<1x512xf32> to vector<8x512xf32>
    %36 = arith.mulf %32, %35 : vector<8x512xf32>
    %c497_i32 = arith.constant 497 : i32
    %37 = tpu.dynamic_rotate %11 by %c497_i32 dim 1 : vector<8x512xf32>, i32 -> vector<8x512xf32>
    %c6 = arith.constant 6 : index
    %c0_21 = arith.constant 0 : index
    %c0_22 = arith.constant 0 : index
    %38 = vector.load %arg8[%c6, %c0_21, %c0_22] : memref<9x1x512xf32, #tpu.memory_space<vmem>>, vector<1x1x512xf32>
    %39 = vector.shape_cast %38 : vector<1x1x512xf32> to vector<1x512xf32>
    %40 = vector.broadcast %39 : vector<1x512xf32> to vector<8x512xf32>
    %41 = arith.mulf %37, %40 : vector<8x512xf32>
    %c496_i32 = arith.constant 496 : i32
    %42 = tpu.dynamic_rotate %11 by %c496_i32 dim 1 : vector<8x512xf32>, i32 -> vector<8x512xf32>
    %c7 = arith.constant 7 : index
    %c0_23 = arith.constant 0 : index
    %c0_24 = arith.constant 0 : index
    %43 = vector.load %arg8[%c7, %c0_23, %c0_24] : memref<9x1x512xf32, #tpu.memory_space<vmem>>, vector<1x1x512xf32>
    %44 = vector.shape_cast %43 : vector<1x1x512xf32> to vector<1x512xf32>
    %45 = vector.broadcast %44 : vector<1x512xf32> to vector<8x512xf32>
    %46 = arith.mulf %42, %45 : vector<8x512xf32>
    %c495_i32 = arith.constant 495 : i32
    %47 = tpu.dynamic_rotate %11 by %c495_i32 dim 1 : vector<8x512xf32>, i32 -> vector<8x512xf32>
    %c8 = arith.constant 8 : index
    %c0_25 = arith.constant 0 : index
    %c0_26 = arith.constant 0 : index
    %48 = vector.load %arg8[%c8, %c0_25, %c0_26] : memref<9x1x512xf32, #tpu.memory_space<vmem>>, vector<1x1x512xf32>
    %49 = vector.shape_cast %48 : vector<1x1x512xf32> to vector<1x512xf32>
    %50 = vector.broadcast %49 : vector<1x512xf32> to vector<8x512xf32>
    %51 = arith.mulf %47, %50 : vector<8x512xf32>
    %52 = tpu.concatenate %16, %21, %26, %31, %11, %36, %41, %46, %51 in 0 : vector<8x512xf32>, vector<8x512xf32>, vector<8x512xf32>, vector<8x512xf32>, vector<8x512xf32>, vector<8x512xf32>, vector<8x512xf32>, vector<8x512xf32>, vector<8x512xf32> -> vector<72x512xf32>
    %c0_27 = arith.constant 0 : index
    %c0_28 = arith.constant 0 : index
    %53 = vector.load %arg4[%c0_27, %c0_28] : memref<8x72xf32, #tpu.memory_space<vmem>>, vector<8x72xf32>
    %cst_29 = arith.constant dense<0.000000e+00> : vector<8x512xf32>
    %54 = tpu.matmul %53, %52, %cst_29 {dimension_numbers = #tpu.dot_dimension_numbers<[1], [0], [0], [1], [0, 0, 1, 1], [], []>} : vector<8x72xf32>, vector<72x512xf32>, vector<8x512xf32> -> vector<8x512xf32>
    %c0_30 = arith.constant 0 : index
    %c0_31 = arith.constant 0 : index
    %55 = vector.load %arg5[%c0_30, %c0_31] : memref<8x1xf32, #tpu.memory_space<vmem>>, vector<8x1xf32>
    %56 = vector.broadcast %55 : vector<8x1xf32> to vector<8x512xf32>
    %57 = arith.addf %54, %56 : vector<8x512xf32>
    %cst_32 = arith.constant 0.000000e+00 : f32
    %58 = vector.broadcast %cst_32 : f32 to vector<8x512xf32>
    %59 = arith.maximumf %57, %58 : vector<8x512xf32>
    %c0_33 = arith.constant 0 : index
    %c0_34 = arith.constant 0 : index
    %60 = vector.load %arg6[%c0_33, %c0_34] : memref<16x8xf32, #tpu.memory_space<vmem>>, vector<16x8xf32>
    %cst_35 = arith.constant dense<0.000000e+00> : vector<16x512xf32>
    %61 = tpu.matmul %60, %59, %cst_35 {dimension_numbers = #tpu.dot_dimension_numbers<[1], [0], [0], [1], [0, 0, 1, 1], [], []>} : vector<16x8xf32>, vector<8x512xf32>, vector<16x512xf32> -> vector<16x512xf32>
    %c0_36 = arith.constant 0 : index
    %c0_37 = arith.constant 0 : index
    %62 = vector.load %arg7[%c0_36, %c0_37] : memref<16x1xf32, #tpu.memory_space<vmem>>, vector<16x1xf32>
    %63 = vector.broadcast %62 : vector<16x1xf32> to vector<16x512xf32>
    %64 = arith.addf %61, %63 : vector<16x512xf32>
    %65 = arith.addf %64, %4 : vector<16x512xf32>
    %cst_38 = arith.constant 0.000000e+00 : f32
    %66 = vector.broadcast %cst_38 : f32 to vector<16x512xf32>
    %67 = arith.maximumf %65, %66 : vector<16x512xf32>
    %68 = vector.extract_strided_slice %67 {offsets = [0, 0], sizes = [16, 256], strides = [1, 1]} : vector<16x512xf32> to vector<16x256xf32>
    %c0_39 = arith.constant 0 : index
    %c0_40 = arith.constant 0 : index
    %c0_41 = arith.constant 0 : index
    %69 = vector.load %arg9[%c0_39, %c0_40, %c0_41] : memref<2x16x256xf32, #tpu.memory_space<vmem>>, vector<1x16x256xf32>
    %70 = vector.shape_cast %69 : vector<1x16x256xf32> to vector<16x256xf32>
    %71 = vector.shape_cast %68 : vector<16x256xf32> to vector<1x16x256xf32>
    tpu.vector_store %arg9[%c0_39, %c0_40, %c0_41], %71 {strides = array<i32>} : memref<2x16x256xf32, #tpu.memory_space<vmem>>, vector<1x16x256xf32>,
    %72 = vector.extract_strided_slice %67 {offsets = [0, 256], sizes = [16, 256], strides = [1, 1]} : vector<16x512xf32> to vector<16x256xf32>
    %c1_42 = arith.constant 1 : index
    %c0_43 = arith.constant 0 : index
    %c0_44 = arith.constant 0 : index
    %73 = vector.load %arg9[%c1_42, %c0_43, %c0_44] : memref<2x16x256xf32, #tpu.memory_space<vmem>>, vector<1x16x256xf32>
    %74 = vector.shape_cast %73 : vector<1x16x256xf32> to vector<16x256xf32>
    %75 = vector.shape_cast %72 : vector<16x256xf32> to vector<1x16x256xf32>
    tpu.vector_store %arg9[%c1_42, %c0_43, %c0_44], %75 {strides = array<i32>} : memref<2x16x256xf32, #tpu.memory_space<vmem>>, vector<1x16x256xf32>,
    return
  }
  func.func @transform_0(%arg0: i32) -> (i32, i32, i32) {
    %c0_i32 = arith.constant 0 : i32
    %c0_i32_0 = arith.constant 0 : i32
    %c0_i32_1 = arith.constant 0 : i32
    return %arg0, %c0_i32, %c0_i32_0 : i32, i32, i32
  }
  func.func @transform_1(%arg0: i32) -> (i32, i32) {
    %c0_i32 = arith.constant 0 : i32
    %c0_i32_0 = arith.constant 0 : i32
    %c0_i32_1 = arith.constant 0 : i32
    return %c0_i32, %c0_i32_0 : i32, i32
  }
  func.func @transform_2(%arg0: i32) -> (i32, i32) {
    %c0_i32 = arith.constant 0 : i32
    %c0_i32_0 = arith.constant 0 : i32
    %c0_i32_1 = arith.constant 0 : i32
    return %c0_i32, %c0_i32_0 : i32, i32
  }
  func.func @transform_3(%arg0: i32) -> (i32, i32) {
    %c0_i32 = arith.constant 0 : i32
    %c0_i32_0 = arith.constant 0 : i32
    %c0_i32_1 = arith.constant 0 : i32
    return %c0_i32, %c0_i32_0 : i32, i32
  }
  func.func @transform_4(%arg0: i32) -> (i32, i32) {
    %c0_i32 = arith.constant 0 : i32
    %c0_i32_0 = arith.constant 0 : i32
    %c0_i32_1 = arith.constant 0 : i32
    return %c0_i32, %c0_i32_0 : i32, i32
  }
  func.func @transform_5(%arg0: i32) -> (i32, i32) {
    %c0_i32 = arith.constant 0 : i32
    %c0_i32_0 = arith.constant 0 : i32
    %c0_i32_1 = arith.constant 0 : i32
    return %c0_i32, %c0_i32_0 : i32, i32
  }
  func.func @transform_6(%arg0: i32) -> (i32, i32) {
    %c0_i32 = arith.constant 0 : i32
    %c0_i32_0 = arith.constant 0 : i32
    %c0_i32_1 = arith.constant 0 : i32
    return %c0_i32, %c0_i32_0 : i32, i32
  }
  func.func @transform_7(%arg0: i32) -> (i32, i32, i32) {
    %c0_i32 = arith.constant 0 : i32
    %c0_i32_0 = arith.constant 0 : i32
    %c0_i32_1 = arith.constant 0 : i32
    %c0_i32_2 = arith.constant 0 : i32
    return %c0_i32, %c0_i32_0, %c0_i32_1 : i32, i32, i32
  }
  func.func @transform_8(%arg0: i32) -> (i32, i32, i32) {
    %c0_i32 = arith.constant 0 : i32
    %c0_i32_0 = arith.constant 0 : i32
    %c0_i32_1 = arith.constant 0 : i32
    return %arg0, %c0_i32, %c0_i32_0 : i32, i32, i32
  }
}

</mosaic_0001>

<llo_original>
// kernel: tpu_custom_call.1
$region0: #{tpu_custom_call.1}
  #allocation0 [shape = 'u32[]', space=smem, size = 0x4, offset = 0x4, fixed_abs, tag = 'smem constant byte address 0x4 - core index']
  #allocation1 [shape = 'u32[144,128]{1,0:T(1,128)}', space=vmem, size = 0x12000, scoped, tag = 'internal scratch']
  %s0 = inlined_call_operand.hbm [shape: f32[4,16,256], index: 0, kind: input, shape index: {}]
  %s1 = inlined_call_operand.vmem [shape: f32[8,16], index: 1, kind: input, shape index: {}]
  %s2 = inlined_call_operand.vmem [shape: f32[8,1], index: 2, kind: input, shape index: {}]
  %s3 = inlined_call_operand.vmem [shape: f32[8,72], index: 3, kind: input, shape index: {}]
  %s4 = inlined_call_operand.vmem [shape: f32[8,1], index: 4, kind: input, shape index: {}]
  %s5 = inlined_call_operand.vmem [shape: f32[16,8], index: 5, kind: input, shape index: {}]
  %s6 = inlined_call_operand.vmem [shape: f32[16,1], index: 6, kind: input, shape index: {}]
  %s7 = inlined_call_operand.vmem [shape: f32[9,1,512], index: 7, kind: input, shape index: {}]
  %s8 = inlined_call_operand.hbm [shape: f32[4,16,256], index: 8, kind: output, shape index: {}]
  %s9 = sld [smem:[#allocation0]]
  $region69: #{tpu_custom_call.1} parent=0
    _
  %s11 = ssub.s32 1, %s9
  %s12 = scalar_select 0, %s11, %s9
  $region1: #{tpu_custom_call.1} parent=0
    #allocation2 [shape = 'u8[65536]{0}', space=vmem, size = 0x10000, scoped, tag = 'input window, operand 0']
    #allocation3 [shape = 's32[2]{0}', space=sflag, size = 0x8, scoped, tag = 'scoped memory for tpu_custom_call.1']
    #allocation4 [shape = 's32[2]{0}', space=sflag, size = 0x8, scoped, tag = 'scoped memory for tpu_custom_call.1']
    #allocation5 [shape = 'u8[65536]{0}', space=vmem, size = 0x10000, scoped, tag = 'output window, operand 0']
    %13 = vsyncpa [#allocation3], 0
    %s14 = scalar_lea.sflag [#allocation3], 1
    %15 = vsyncpa %s14, 0
    %16 = vsyncpa [#allocation4], 0
    %s17 = scalar_lea.sflag [#allocation4], 1
    %18 = vsyncpa %s17, 0
    loop: start=0, step=1, limit=4
    $region2: #{tpu_custom_call.1} parent=1 // loop_pre_header
      _
    $region3: #{tpu_custom_call.1} parent=1 // loop_header
      %s20 = sphi 0, %s24
      %p21 = scmp.ge.s32.totalorder %s20, 4
      %s30 = sphi 0, %s32
      %s33 = sphi 0, %s30
      %s34 = sphi 0, %s33
      %s50 = sphi 0, %s34
      %s54 = sphi 0, %s54
      %s56 = sphi 0, %s54
      %s57 = sphi 0, %s56
      %s71 = sphi 0, %s57
      %s75 = sphi 0, %s75
      %s77 = sphi 0, %s75
      %s78 = sphi 0, %s77
      %s92 = sphi 0, %s78
      %s96 = sphi 0, %s96
      %s98 = sphi 0, %s96
      %s99 = sphi 0, %s98
      %s113 = sphi 0, %s99
      %s117 = sphi 0, %s117
      %s119 = sphi 0, %s117
      %s120 = sphi 0, %s119
      %s134 = sphi 0, %s120
      %s138 = sphi 0, %s138
      %s140 = sphi 0, %s138
      %s141 = sphi 0, %s140
      %s155 = sphi 0, %s141
      %s159 = sphi 0, %s159
      %s161 = sphi 0, %s159
      %s162 = sphi 0, %s161
      %s176 = sphi 0, %s162
      %s180 = sphi 0, %s180
      %s182 = sphi 0, %s180
      %s183 = sphi 0, %s182
      %s197 = sphi 0, %s183
      %s203 = sphi 0, %s205
      %s206 = sphi 0, %s203
      %s207 = sphi 0, %s206
      %s223 = sphi 0, %s207
    $region4: #{tpu_custom_call.1} parent=1 // loop_header_branch
      %23 = sbr.rel (%p21) target = $region8
    $region5: #{tpu_custom_call.1} parent=1 // loop_body
      %s25 = ssub.s32 %s20, 1
      %s26 = ssub.s32 %s20, 2
      %s27 = sadd.s32 %s20, 1
      %s28 = ssub.s32 %s20, %s27
      %p29 = scmp.eq.s32.totalorder %s28, 0
      %s31 = sadd.s32 %s30, 1
      %s32 = scalar_select %p29, %s30, %s31
      %p35 = pneg %p29
      %p36 = scmp.eq.s32.totalorder %s20, 1
      %p37 = por %p35, %p36
      %p38 = scmp.ne.s32.totalorder %s30, %s33
      %p39 = scmp.eq.s32.totalorder %s20, 0
      %p40 = por %p38, %p39
      %p41 = scmp.ne.s32.totalorder %s30, %s33
      %p42 = scmp.eq.s32.totalorder %s25, 1
      %p43 = por %p41, %p42
      %p44 = scmp.ne.s32.totalorder %s33, %s34
      %p45 = scmp.eq.s32.totalorder %s25, 0
      %p46 = por %p44, %p45
      %p47 = scmp.ne.s32.totalorder %s33, %s34
      %p48 = scmp.eq.s32.totalorder %s26, 1
      %p49 = por %p47, %p48
      %p51 = scmp.ne.s32.totalorder %s34, %s50
      %p52 = scmp.eq.s32.totalorder %s26, 0
      %p53 = por %p51, %p52
      %s55 = sadd.s32 %s54, 1
      %p58 = scmp.eq.s32.totalorder %s20, 1
      %p59 = scmp.ne.s32.totalorder %s54, %s56
      %p60 = scmp.eq.s32.totalorder %s20, 0
      %p61 = por %p59, %p60
      %p62 = scmp.ne.s32.totalorder %s54, %s56
      %p63 = scmp.eq.s32.totalorder %s25, 1
      %p64 = por %p62, %p63
      %p65 = scmp.ne.s32.totalorder %s56, %s57
      %p66 = scmp.eq.s32.totalorder %s25, 0
      %p67 = por %p65, %p66
      %p68 = scmp.ne.s32.totalorder %s56, %s57
      %p69 = scmp.eq.s32.totalorder %s26, 1
      %p70 = por %p68, %p69
      %p72 = scmp.ne.s32.totalorder %s57, %s71
      %p73 = scmp.eq.s32.totalorder %s26, 0
      %p74 = por %p72, %p73
      %s76 = sadd.s32 %s75, 1
      %p79 = scmp.eq.s32.totalorder %s20, 1
      %p80 = scmp.ne.s32.totalorder %s75, %s77
      %p81 = scmp.eq.s32.totalorder %s20, 0
      %p82 = por %p80, %p81
      %p83 = scmp.ne.s32.totalorder %s75, %s77
      %p84 = scmp.eq.s32.totalorder %s25, 1
      %p85 = por %p83, %p84
      %p86 = scmp.ne.s32.totalorder %s77, %s78
      %p87 = scmp.eq.s32.totalorder %s25, 0
      %p88 = por %p86, %p87
      %p89 = scmp.ne.s32.totalorder %s77, %s78
      %p90 = scmp.eq.s32.totalorder %s26, 1
      %p91 = por %p89, %p90
      %p93 = scmp.ne.s32.totalorder %s78, %s92
      %p94 = scmp.eq.s32.totalorder %s26, 0
      %p95 = por %p93, %p94
      %s97 = sadd.s32 %s96, 1
      %p100 = scmp.eq.s32.totalorder %s20, 1
      %p101 = scmp.ne.s32.totalorder %s96, %s98
      %p102 = scmp.eq.s32.totalorder %s20, 0
      %p103 = por %p101, %p102
      %p104 = scmp.ne.s32.totalorder %s96, %s98
      %p105 = scmp.eq.s32.totalorder %s25, 1
      %p106 = por %p104, %p105
      %p107 = scmp.ne.s32.totalorder %s98, %s99
      %p108 = scmp.eq.s32.totalorder %s25, 0
      %p109 = por %p107, %p108
      %p110 = scmp.ne.s32.totalorder %s98, %s99
      %p111 = scmp.eq.s32.totalorder %s26, 1
      %p112 = por %p110, %p111
      %p114 = scmp.ne.s32.totalorder %s99, %s113
      %p115 = scmp.eq.s32.totalorder %s26, 0
      %p116 = por %p114, %p115
      %s118 = sadd.s32 %s117, 1
      %p121 = scmp.eq.s32.totalorder %s20, 1
      %p122 = scmp.ne.s32.totalorder %s117, %s119
      %p123 = scmp.eq.s32.totalorder %s20, 0
      %p124 = por %p122, %p123
      %p125 = scmp.ne.s32.totalorder %s117, %s119
      %p126 = scmp.eq.s32.totalorder %s25, 1
      %p127 = por %p125, %p126
      %p128 = scmp.ne.s32.totalorder %s119, %s120
      %p129 = scmp.eq.s32.totalorder %s25, 0
      %p130 = por %p128, %p129
      %p131 = scmp.ne.s32.totalorder %s119, %s120
      %p132 = scmp.eq.s32.totalorder %s26, 1
      %p133 = por %p131, %p132
      %p135 = scmp.ne.s32.totalorder %s120, %s134
      %p136 = scmp.eq.s32.totalorder %s26, 0
      %p137 = por %p135, %p136
      %s139 = sadd.s32 %s138, 1
      %p142 = scmp.eq.s32.totalorder %s20, 1
      %p143 = scmp.ne.s32.totalorder %s138, %s140
      %p144 = scmp.eq.s32.totalorder %s20, 0
      %p145 = por %p143, %p144
      %p146 = scmp.ne.s32.totalorder %s138, %s140
      %p147 = scmp.eq.s32.totalorder %s25, 1
      %p148 = por %p146, %p147
      %p149 = scmp.ne.s32.totalorder %s140, %s141
      %p150 = scmp.eq.s32.totalorder %s25, 0
      %p151 = por %p149, %p150
      %p152 = scmp.ne.s32.totalorder %s140, %s141
      %p153 = scmp.eq.s32.totalorder %s26, 1
      %p154 = por %p152, %p153
      %p156 = scmp.ne.s32.totalorder %s141, %s155
      %p157 = scmp.eq.s32.totalorder %s26, 0
      %p158 = por %p156, %p157
      %s160 = sadd.s32 %s159, 1
      %p163 = scmp.eq.s32.totalorder %s20, 1
      %p164 = scmp.ne.s32.totalorder %s159, %s161
      %p165 = scmp.eq.s32.totalorder %s20, 0
      %p166 = por %p164, %p165
      %p167 = scmp.ne.s32.totalorder %s159, %s161
      %p168 = scmp.eq.s32.totalorder %s25, 1
      %p169 = por %p167, %p168
      %p170 = scmp.ne.s32.totalorder %s161, %s162
      %p171 = scmp.eq.s32.totalorder %s25, 0
      %p172 = por %p170, %p171
      %p173 = scmp.ne.s32.totalorder %s161, %s162
      %p174 = scmp.eq.s32.totalorder %s26, 1
      %p175 = por %p173, %p174
      %p177 = scmp.ne.s32.totalorder %s162, %s176
      %p178 = scmp.eq.s32.totalorder %s26, 0
      %p179 = por %p177, %p178
      %s181 = sadd.s32 %s180, 1
      %p184 = scmp.eq.s32.totalorder %s20, 1
      %p185 = scmp.ne.s32.totalorder %s180, %s182
      %p186 = scmp.eq.s32.totalorder %s20, 0
      %p187 = por %p185, %p186
      %p188 = scmp.ne.s32.totalorder %s180, %s182
      %p189 = scmp.eq.s32.totalorder %s25, 1
      %p190 = por %p188, %p189
      %p191 = scmp.ne.s32.totalorder %s182, %s183
      %p192 = scmp.eq.s32.totalorder %s25, 0
      %p193 = por %p191, %p192
      %p194 = scmp.ne.s32.totalorder %s182, %s183
      %p195 = scmp.eq.s32.totalorder %s26, 1
      %p196 = por %p194, %p195
      %p198 = scmp.ne.s32.totalorder %s183, %s197
      %p199 = scmp.eq.s32.totalorder %s26, 0
      %p200 = por %p198, %p199
      %s201 = ssub.s32 %s20, %s27
      %p202 = scmp.eq.s32.totalorder %s201, 0
      %s204 = sadd.s32 %s203, 1
      %s205 = scalar_select %p202, %s203, %s204
      %p208 = pneg %p202
      %p209 = scmp.eq.s32.totalorder %s20, 1
      %p210 = por %p208, %p209
      %p211 = scmp.ne.s32.totalorder %s203, %s206
      %p212 = scmp.eq.s32.totalorder %s20, 0
      %p213 = por %p211, %p212
      %p214 = scmp.ne.s32.totalorder %s203, %s206
      %p215 = scmp.eq.s32.totalorder %s25, 1
      %p216 = por %p214, %p215
      %p217 = scmp.ne.s32.totalorder %s206, %s207
      %p218 = scmp.eq.s32.totalorder %s25, 0
      %p219 = por %p217, %p218
      %p220 = scmp.ne.s32.totalorder %s206, %s207
      %p221 = scmp.eq.s32.totalorder %s26, 1
      %p222 = por %p220, %p221
      %p224 = scmp.ne.s32.totalorder %s207, %s223
      %p225 = scmp.eq.s32.totalorder %s26, 0
      %p226 = por %p224, %p225
      %p227 = scmp.le.s32.totalorder 1, %s20
      %p228 = scmp.lt.s32.totalorder %s20, 3
      %p229 = pnand %p227, %p228
      %p230 = pneg %p229
      // Predicated region
      $region9: #{tpu_custom_call.1} parent=5 // pred_check
        _
      $region10: #{tpu_custom_call.1} parent=5 // pred_check_branch
        %232 = sbr.rel (%p229) target = $region12
      $region11: #{tpu_custom_call.1} parent=5 // pred_region
        %s233 = ssub.s32 %s20, 1
        // Predicated region
        $region13: #{tpu_custom_call.1} parent=11 // pred_check
          %p234 = pneg %p67
        $region14: #{tpu_custom_call.1} parent=11 // pred_check_branch
          %236 = sbr.rel (%p234) target = $region16
        $region15: #{tpu_custom_call.1} parent=11 // pred_region
          _
        $region16: #{tpu_custom_call.1} parent=11 // pred_fallthru
          _
        // Predicated region
        $region17: #{tpu_custom_call.1} parent=11 // pred_check
          %p237 = pneg %p88
        $region18: #{tpu_custom_call.1} parent=11 // pred_check_branch
          %239 = sbr.rel (%p237) target = $region20
        $region19: #{tpu_custom_call.1} parent=11 // pred_region
          _
        $region20: #{tpu_custom_call.1} parent=11 // pred_fallthru
          _
        // Predicated region
        $region21: #{tpu_custom_call.1} parent=11 // pred_check
          %p240 = pneg %p109
        $region22: #{tpu_custom_call.1} parent=11 // pred_check_branch
          %242 = sbr.rel (%p240) target = $region24
        $region23: #{tpu_custom_call.1} parent=11 // pred_region
          _
        $region24: #{tpu_custom_call.1} parent=11 // pred_fallthru
          _
        // Predicated region
        $region25: #{tpu_custom_call.1} parent=11 // pred_check
          %p243 = pneg %p130
        $region26: #{tpu_custom_call.1} parent=11 // pred_check_branch
          %245 = sbr.rel (%p243) target = $region28
        $region27: #{tpu_custom_call.1} parent=11 // pred_region
          _
        $region28: #{tpu_custom_call.1} parent=11 // pred_fallthru
          _
        // Predicated region
        $region29: #{tpu_custom_call.1} parent=11 // pred_check
          %p246 = pneg %p151
        $region30: #{tpu_custom_call.1} parent=11 // pred_check_branch
          %248 = sbr.rel (%p246) target = $region32
        $region31: #{tpu_custom_call.1} parent=11 // pred_region
          _
        $region32: #{tpu_custom_call.1} parent=11 // pred_fallthru
          _
        // Predicated region
        $region33: #{tpu_custom_call.1} parent=11 // pred_check
          %p249 = pneg %p172
        $region34: #{tpu_custom_call.1} parent=11 // pred_check_branch
          %251 = sbr.rel (%p249) target = $region36
        $region35: #{tpu_custom_call.1} parent=11 // pred_region
          _
        $region36: #{tpu_custom_call.1} parent=11 // pred_fallthru
          _
        // Predicated region
        $region37: #{tpu_custom_call.1} parent=11 // pred_check
          %p252 = pneg %p193
        $region38: #{tpu_custom_call.1} parent=11 // pred_check_branch
          %254 = sbr.rel (%p252) target = $region40
        $region39: #{tpu_custom_call.1} parent=11 // pred_region
          _
        $region40: #{tpu_custom_call.1} parent=11 // pred_fallthru
          _
      $region12: #{tpu_custom_call.1} parent=5 // pred_fallthru
        _
      %p255 = scmp.lt.s32.totalorder %s20, 2
      // Predicated region
      $region41: #{tpu_custom_call.1} parent=5 // pred_check
        %p256 = pneg %p255
      $region42: #{tpu_custom_call.1} parent=5 // pred_check_branch
        %258 = sbr.rel (%p256) target = $region44
      $region43: #{tpu_custom_call.1} parent=5 // pred_region
        // Predicated region
        $region45: #{tpu_custom_call.1} parent=43 // pred_check
          %p259 = pneg %p40
        $region46: #{tpu_custom_call.1} parent=43 // pred_check_branch
          %261 = sbr.rel (%p259) target = $region48
        $region47: #{tpu_custom_call.1} parent=43 // pred_region
          %s262 = sand.u32 %s30, 1
          %s263 = scalar_lea.sflag [#allocation3], %s262
          %s264 = sand.u32 %s30, 1
          %s265 = smul.addr %s264, 64
          %s266 = scalar_lea.vmem [#allocation2], %s265
          %s267 = smul.u32 2, %s20
          %s269 = ssub.s32 1024, 1024
          %270 = vsyncadd %s263, %s269
          %s271 = smul.addr %s267, 4
          %s272 = smul.addr %s271, 128
          %s273 = scalar_lea.hbm %s0, %s272
          %s274 = sshll.u32 %s266, 4
          %s275 = int_to_ptr.vmem [resolvable:$true] %s274
          %280 = dma.hbm_to_vmem [thread:$0]  %s273, 1024, %s275, %s263, 256, 256, 16
        $region48: #{tpu_custom_call.1} parent=43 // pred_fallthru
          _
      $region44: #{tpu_custom_call.1} parent=5 // pred_fallthru
        _
      %p281 = scmp.le.s32.totalorder 1, %s20
      %p282 = scmp.lt.s32.totalorder %s20, 3
      %p283 = pnand %p281, %p282
      %p284 = pneg %p283
      // Predicated region
      $region49: #{tpu_custom_call.1} parent=5 // pred_check
        _
      $region50: #{tpu_custom_call.1} parent=5 // pred_check_branch
        %286 = sbr.rel (%p283) target = $region52
      $region51: #{tpu_custom_call.1} parent=5 // pred_region
        %s287 = ssub.s32 %s20, 1
        %s288 = sand.u32 %s33, 1
        %s289 = scalar_lea.sflag [#allocation3], %s288
        %s290 = sand.u32 %s33, 1
        %s291 = smul.addr %s290, 64
        %s292 = scalar_lea.vmem [#allocation2], %s291
        // Predicated region
        $region53: #{tpu_custom_call.1} parent=51 // pred_check
          %p293 = pneg %p46
        $region54: #{tpu_custom_call.1} parent=51 // pred_check_branch
          %295 = sbr.rel (%p293) target = $region56
        $region55: #{tpu_custom_call.1} parent=51 // pred_region
          %296 = dma.done %s289, 1024
        $region56: #{tpu_custom_call.1} parent=51 // pred_fallthru
          _
        %s297 = sand.u32 %s33, 1
        %s298 = scalar_lea.sflag [#allocation3], %s297
        %s299 = sand.u32 %s33, 1
        %s300 = smul.addr %s299, 64
        %s301 = scalar_lea.vmem [#allocation2], %s300
        %p302 = pneg %p46
        %p303 = pneg %p43
        %p304 = pneg %p67
        %p305 = pneg %p64
        %p306 = pneg %p88
        %p307 = pneg %p85
        %p308 = pneg %p109
        %p309 = pneg %p106
        %p310 = pneg %p130
        %p311 = pneg %p127
        %p312 = pneg %p151
        %p313 = pneg %p148
        %p314 = pneg %p172
        %p315 = pneg %p169
        %p316 = pneg %p193
        %p317 = pneg %p190
        %p318 = pneg %p219
        %p319 = pneg %p216
        %s320 = sand.u32 %s206, 1
        %s321 = scalar_lea.sflag [#allocation4], %s320
        %s322 = sand.u32 %s206, 1
        %s323 = smul.addr %s322, 64
        %s324 = scalar_lea.vmem [#allocation5], %s323
        %s325 = smul.u32 2, %s25
        %s326 = smul.u32 2, %s25
        %v327 = vld [vmem:[%s292] sm:$0xff]
        %v328 = vld [vmem:[%s292 + $0x8] sm:$0xff]
        %v329 = vld [vmem:[%s292 + $0x10] sm:$0xff]
        %v330 = vld [vmem:[%s292 + $0x18] sm:$0xff]
        %s331 = scalar_lea.vmem %s292, 32 [#allocation2]
        %v332 = vld [vmem:[%s331] sm:$0xff]
        %v333 = vld [vmem:[%s331 + $0x8] sm:$0xff]
        %v334 = vld [vmem:[%s331 + $0x10] sm:$0xff]
        %v335 = vld [vmem:[%s331 + $0x18] sm:$0xff]
        %v336 = vld [vmem:[%s1] sm:$0xff]
        %v337 = vld [vmem:[%s2] sm:$0xff]
        %339 = vset.pattern.permute.xlu0 0
        %340 = vperm.xlu0 %339, %v337
        %v341 = vpop.permute.xlu0 %340
        %vm343 = vcmask 130048
        %v345 = vsel %vm343, %v336, 0
        %347 = vmatprep.subr.mxu0 %v328
        %348 = vmatpush1.msra.mxu0 %v327
        %349 = vmatprep.subr.mxu0 %v330
        %350 = vmatpush1.msra.mxu0 %v329
        %351 = vmatprep.subr.mxu0 0.0
        %352 = vmatpush1.msra.mxu0 0.0
        %353 = vmatprep.subr.mxu0 0.0
        %354 = vmatpush1.msra.mxu0 0.0
        %355 = vmatprep.subr.mxu0 0.0
        %356 = vmatpush1.msra.mxu0 0.0
        %357 = vmatprep.subr.mxu0 0.0
        %358 = vmatpush1.msra.mxu0 0.0
        %359 = vmatprep.subr.mxu0 0.0
        %360 = vmatpush1.msra.mxu0 0.0
        %361 = vmatprep.subr.mxu0 0.0
        %362 = vmatpush1.msra.mxu0 0.0
        %363 = vmatprep.subr.mxu0 0.0
        %364 = vmatpush1.msra.mxu0 0.0
        %365 = vmatprep.subr.mxu0 0.0
        %366 = vmatpush1.msra.mxu0 0.0
        %367 = vmatprep.subr.mxu0 0.0
        %368 = vmatpush1.msra.mxu0 0.0
        %369 = vmatprep.subr.mxu0 0.0
        %370 = vmatpush1.msra.mxu0 0.0
        %371 = vmatprep.subr.mxu0 0.0
        %372 = vmatpush1.msra.mxu0 0.0
        %373 = vmatprep.subr.mxu0 0.0
        %374 = vmatpush1.msra.mxu0 0.0
        %375 = vmatprep.subr.mxu0 0.0
        %376 = vmatpush1.msra.mxu0 0.0
        %377 = vmatprep.subr.mxu0 0.0
        %378 = vmatpush1.msra.mxu0 0.0
        %379 = vmatprep.subr.mxu0 0.0
        %380 = vmatpush1.msra.mxu0 0.0
        %381 = vmatprep.subr.mxu0 0.0
        %382 = vmatpush1.msra.mxu0 0.0
        %383 = vmatprep.subr.mxu0 0.0
        %384 = vmatpush1.msra.mxu0 0.0
        %385 = vmatprep.subr.mxu0 0.0
        %386 = vmatpush1.msra.mxu0 0.0
        %387 = vmatprep.subr.mxu0 0.0
        %388 = vmatpush1.msra.mxu0 0.0
        %389 = vmatprep.subr.mxu0 0.0
        %390 = vmatpush1.msra.mxu0 0.0
        %391 = vmatprep.subr.mxu0 0.0
        %392 = vmatpush1.msra.mxu0 0.0
        %393 = vmatprep.subr.mxu0 0.0
        %394 = vmatpush1.msra.mxu0 0.0
        %395 = vmatprep.subr.mxu0 0.0
        %396 = vmatpush1.msra.mxu0 0.0
        %397 = vmatprep.subr.mxu0 0.0
        %398 = vmatpush1.msra.mxu0 0.0
        %399 = vmatprep.subr.mxu0 0.0
        %400 = vmatpush1.msra.mxu0 0.0
        %401 = vmatprep.subr.mxu0 0.0
        %402 = vmatpush1.msra.mxu0 0.0
        %403 = vmatprep.subr.mxu0 0.0
        %404 = vmatpush1.msra.mxu0 0.0
        %405 = vmatprep.subr.mxu0 0.0
        %406 = vmatpush1.msra.mxu0 0.0
        %407 = vmatprep.subr.mxu0 0.0
        %408 = vmatpush1.msra.mxu0 0.0
        %409 = vmatprep.subr.mxu0 0.0
        %410 = vmatpush1.msra.mxu0 0.0
        %411 = vmatprep.mubr.f32.mxu0 0.0
        %412 = vmatmul.mubr.f32.gmra.mrb[0].mxu0 %v345
        %v413 = vpop.f32.mrb[0].mxu0
        %v414 = vadd.f32 %v341, %v413
        %v415 = vpop.f32.mrb[0].mxu0
        %v416 = vadd.f32 %v341, %v415
        %417 = vdwg.mxu0
        %418 = vmatprep.subr.mxu0 %v333
        %419 = vmatpush1.msra.mxu0 %v332
        %420 = vmatprep.subr.mxu0 %v335
        %421 = vmatpush1.msra.mxu0 %v334
        %422 = vmatprep.subr.mxu0 0.0
        %423 = vmatpush1.msra.mxu0 0.0
        %424 = vmatprep.subr.mxu0 0.0
        %425 = vmatpush1.msra.mxu0 0.0
        %426 = vmatprep.subr.mxu0 0.0
        %427 = vmatpush1.msra.mxu0 0.0
        %428 = vmatprep.subr.mxu0 0.0
        %429 = vmatpush1.msra.mxu0 0.0
        %430 = vmatprep.subr.mxu0 0.0
        %431 = vmatpush1.msra.mxu0 0.0
        %432 = vmatprep.subr.mxu0 0.0
        %433 = vmatpush1.msra.mxu0 0.0
        %434 = vmatprep.subr.mxu0 0.0
        %435 = vmatpush1.msra.mxu0 0.0
        %436 = vmatprep.subr.mxu0 0.0
        %437 = vmatpush1.msra.mxu0 0.0
        %438 = vmatprep.subr.mxu0 0.0
        %439 = vmatpush1.msra.mxu0 0.0
        %440 = vmatprep.subr.mxu0 0.0
        %441 = vmatpush1.msra.mxu0 0.0
        %442 = vmatprep.subr.mxu0 0.0
        %443 = vmatpush1.msra.mxu0 0.0
        %444 = vmatprep.subr.mxu0 0.0
        %445 = vmatpush1.msra.mxu0 0.0
        %446 = vmatprep.subr.mxu0 0.0
        %447 = vmatpush1.msra.mxu0 0.0
        %448 = vmatprep.subr.mxu0 0.0
        %449 = vmatpush1.msra.mxu0 0.0
        %450 = vmatprep.subr.mxu0 0.0
        %451 = vmatpush1.msra.mxu0 0.0
        %452 = vmatprep.subr.mxu0 0.0
        %453 = vmatpush1.msra.mxu0 0.0
        %454 = vmatprep.subr.mxu0 0.0
        %455 = vmatpush1.msra.mxu0 0.0
        %456 = vmatprep.subr.mxu0 0.0
        %457 = vmatpush1.msra.mxu0 0.0
        %458 = vmatprep.subr.mxu0 0.0
        %459 = vmatpush1.msra.mxu0 0.0
        %460 = vmatprep.subr.mxu0 0.0
        %461 = vmatpush1.msra.mxu0 0.0
        %462 = vmatprep.subr.mxu0 0.0
        %463 = vmatpush1.msra.mxu0 0.0
        %464 = vmatprep.subr.mxu0 0.0
        %465 = vmatpush1.msra.mxu0 0.0
        %466 = vmatprep.subr.mxu0 0.0
        %467 = vmatpush1.msra.mxu0 0.0
        %468 = vmatprep.subr.mxu0 0.0
        %469 = vmatpush1.msra.mxu0 0.0
        %470 = vmatprep.subr.mxu0 0.0
        %471 = vmatpush1.msra.mxu0 0.0
        %472 = vmatprep.subr.mxu0 0.0
        %473 = vmatpush1.msra.mxu0 0.0
        %474 = vmatprep.subr.mxu0 0.0
        %475 = vmatpush1.msra.mxu0 0.0
        %476 = vmatprep.subr.mxu0 0.0
        %477 = vmatpush1.msra.mxu0 0.0
        %478 = vmatprep.subr.mxu0 0.0
        %479 = vmatpush1.msra.mxu0 0.0
        %480 = vmatprep.subr.mxu0 0.0
        %481 = vmatpush1.msra.mxu0 0.0
        %482 = vmatprep.mubr.f32.mxu0 0.0
        %483 = vmatmul.mubr.f32.gmra.mrb[0].mxu0 %v345
        %v484 = vpop.f32.mrb[0].mxu0
        %v485 = vadd.f32 %v341, %v484
        %v486 = vpop.f32.mrb[0].mxu0
        %v487 = vadd.f32 %v341, %v486
        %488 = vdwg.mxu0
        %v489 = vmax.f32 %v414, 0.0
        %v490 = vmax.f32 %v416, 0.0
        %v491 = vmax.f32 %v485, 0.0
        %v492 = vmax.f32 %v487, 0.0
        %493 = vrot.lane.b32.xlu0 %v489, 17
        %v494 = vpop.permute.xlu0 %493
        %495 = vrot.lane.b32.xlu0 %v490, 17
        %v496 = vpop.permute.xlu0 %495
        %497 = vrot.lane.b32.xlu0 %v491, 17
        %v498 = vpop.permute.xlu0 %497
        %499 = vrot.lane.b32.xlu0 %v492, 17
        %v500 = vpop.permute.xlu0 %499
        %v501 = vlaneseq
        %v502 = vand.u32 %v501, 127
        %vm503 = vcmp.lt.s32.totalorder %v502, 17
        %v504 = vsel %vm503, %v498, %v500
        %v505 = vsel %vm503, %v496, %v498
        %v506 = vsel %vm503, %v494, %v496
        %v507 = vsel %vm503, %v500, %v494
        %v508 = vld [vmem:[%s7] sm:$0xf]
        %v510 = vlaneseq
        %v511 = vshrl.u32 %v510, 7
        %v512 = vsub.s32 0, %v511
        %v513 = vrot.slane %v508, %v512
        %v514 = vlaneseq
        %v515 = vshrl.u32 %v514, 7
        %v516 = vsub.s32 1, %v515
        %v517 = vrot.slane %v508, %v516
        %v518 = vlaneseq
        %v519 = vshrl.u32 %v518, 7
        %v520 = vsub.s32 2, %v519
        %v521 = vrot.slane %v508, %v520
        %v522 = vlaneseq
        %v523 = vshrl.u32 %v522, 7
        %v524 = vsub.s32 3, %v523
        %v525 = vrot.slane %v508, %v524
        %v530 = vmul.f32 %v507, %v513
        %v531 = vmul.f32 %v506, %v517
        %v532 = vmul.f32 %v505, %v521
        %v533 = vmul.f32 %v504, %v525
        %534 = vrot.lane.b32.xlu0 %v489, 16
        %v535 = vpop.permute.xlu0 %534
        %536 = vrot.lane.b32.xlu0 %v490, 16
        %v537 = vpop.permute.xlu0 %536
        %538 = vrot.lane.b32.xlu0 %v491, 16
        %v539 = vpop.permute.xlu0 %538
        %540 = vrot.lane.b32.xlu0 %v492, 16
        %v541 = vpop.permute.xlu0 %540
        %vm542 = vcmp.lt.s32.totalorder %v502, 16
        %v543 = vsel %vm542, %v539, %v541
        %v544 = vsel %vm542, %v537, %v539
        %v545 = vsel %vm542, %v535, %v537
        %v546 = vsel %vm542, %v541, %v535
        %s547 = scalar_lea.vmem %s7, 4
        %v548 = vld [vmem:[%s547] sm:$0xf]
        %v550 = vlaneseq
        %v551 = vshrl.u32 %v550, 7
        %v552 = vsub.s32 0, %v551
        %v553 = vrot.slane %v548, %v552
        %v554 = vlaneseq
        %v555 = vshrl.u32 %v554, 7
        %v556 = vsub.s32 1, %v555
        %v557 = vrot.slane %v548, %v556
        %v558 = vlaneseq
        %v559 = vshrl.u32 %v558, 7
        %v560 = vsub.s32 2, %v559
        %v561 = vrot.slane %v548, %v560
        %v562 = vlaneseq
        %v563 = vshrl.u32 %v562, 7
        %v564 = vsub.s32 3, %v563
        %v565 = vrot.slane %v548, %v564
        %v570 = vmul.f32 %v546, %v553
        %v571 = vmul.f32 %v545, %v557
        %v572 = vmul.f32 %v544, %v561
        %v573 = vmul.f32 %v543, %v565
        %574 = vrot.lane.b32.xlu0 %v489, 15
        %v575 = vpop.permute.xlu0 %574
        %576 = vrot.lane.b32.xlu0 %v490, 15
        %v577 = vpop.permute.xlu0 %576
        %578 = vrot.lane.b32.xlu0 %v491, 15
        %v579 = vpop.permute.xlu0 %578
        %580 = vrot.lane.b32.xlu0 %v492, 15
        %v581 = vpop.permute.xlu0 %580
        %vm582 = vcmp.lt.s32.totalorder %v502, 15
        %v583 = vsel %vm582, %v579, %v581
        %v584 = vsel %vm582, %v577, %v579
        %v585 = vsel %vm582, %v575, %v577
        %v586 = vsel %vm582, %v581, %v575
        %s587 = scalar_lea.vmem %s7, 8
        %v588 = vld [vmem:[%s587] sm:$0xf]
        %v590 = vlaneseq
        %v591 = vshrl.u32 %v590, 7
        %v592 = vsub.s32 0, %v591
        %v593 = vrot.slane %v588, %v592
        %v594 = vlaneseq
        %v595 = vshrl.u32 %v594, 7
        %v596 = vsub.s32 1, %v595
        %v597 = vrot.slane %v588, %v596
        %v598 = vlaneseq
        %v599 = vshrl.u32 %v598, 7
        %v600 = vsub.s32 2, %v599
        %v601 = vrot.slane %v588, %v600
        %v602 = vlaneseq
        %v603 = vshrl.u32 %v602, 7
        %v604 = vsub.s32 3, %v603
        %v605 = vrot.slane %v588, %v604
        %v610 = vmul.f32 %v586, %v593
        %v611 = vmul.f32 %v585, %v597
        %v612 = vmul.f32 %v584, %v601
        %v613 = vmul.f32 %v583, %v605
        %614 = vrot.lane.b32.xlu0 %v489, 1
        %v615 = vpop.permute.xlu0 %614
        %616 = vrot.lane.b32.xlu0 %v490, 1
        %v617 = vpop.permute.xlu0 %616
        %618 = vrot.lane.b32.xlu0 %v491, 1
        %v619 = vpop.permute.xlu0 %618
        %620 = vrot.lane.b32.xlu0 %v492, 1
        %v621 = vpop.permute.xlu0 %620
        %vm622 = vcmp.lt.s32.totalorder %v502, 1
        %v623 = vsel %vm622, %v619, %v621
        %v624 = vsel %vm622, %v617, %v619
        %v625 = vsel %vm622, %v615, %v617
        %v626 = vsel %vm622, %v621, %v615
        %s627 = scalar_lea.vmem %s7, 12
        %v628 = vld [vmem:[%s627] sm:$0xf]
        %v630 = vlaneseq
        %v631 = vshrl.u32 %v630, 7
        %v632 = vsub.s32 0, %v631
        %v633 = vrot.slane %v628, %v632
        %v634 = vlaneseq
        %v635 = vshrl.u32 %v634, 7
        %v636 = vsub.s32 1, %v635
        %v637 = vrot.slane %v628, %v636
        %v638 = vlaneseq
        %v639 = vshrl.u32 %v638, 7
        %v640 = vsub.s32 2, %v639
        %v641 = vrot.slane %v628, %v640
        %v642 = vlaneseq
        %v643 = vshrl.u32 %v642, 7
        %v644 = vsub.s32 3, %v643
        %v645 = vrot.slane %v628, %v644
        %v650 = vmul.f32 %v626, %v633
        %v651 = vmul.f32 %v625, %v637
        %v652 = vmul.f32 %v624, %v641
        %v653 = vmul.f32 %v623, %v645
        %654 = vrot.lane.b32.xlu0 %v489, 127
        %v655 = vpop.permute.xlu0 %654
        %656 = vrot.lane.b32.xlu0 %v490, 127
        %v657 = vpop.permute.xlu0 %656
        %658 = vrot.lane.b32.xlu0 %v491, 127
        %v659 = vpop.permute.xlu0 %658
        %660 = vrot.lane.b32.xlu0 %v492, 127
        %v661 = vpop.permute.xlu0 %660
        %vm662 = vcmp.lt.s32.totalorder %v502, 127
        %v663 = vsel %vm662, %v659, %v661
        %v664 = vsel %vm662, %v657, %v659
        %v665 = vsel %vm662, %v655, %v657
        %v666 = vsel %vm662, %v661, %v655
        %s667 = scalar_lea.vmem %s7, 20
        %v668 = vld [vmem:[%s667] sm:$0xf]
        %v670 = vlaneseq
        %v671 = vshrl.u32 %v670, 7
        %v672 = vsub.s32 0, %v671
        %v673 = vrot.slane %v668, %v672
        %v674 = vlaneseq
        %v675 = vshrl.u32 %v674, 7
        %v676 = vsub.s32 1, %v675
        %v677 = vrot.slane %v668, %v676
        %v678 = vlaneseq
        %v679 = vshrl.u32 %v678, 7
        %v680 = vsub.s32 2, %v679
        %v681 = vrot.slane %v668, %v680
        %v682 = vlaneseq
        %v683 = vshrl.u32 %v682, 7
        %v684 = vsub.s32 3, %v683
        %v685 = vrot.slane %v668, %v684
        %v690 = vmul.f32 %v665, %v673
        %v691 = vmul.f32 %v664, %v677
        %v692 = vmul.f32 %v663, %v681
        %v693 = vmul.f32 %v666, %v685
        %694 = vrot.lane.b32.xlu0 %v489, 113
        %v695 = vpop.permute.xlu0 %694
        %696 = vrot.lane.b32.xlu0 %v490, 113
        %v697 = vpop.permute.xlu0 %696
        %698 = vrot.lane.b32.xlu0 %v491, 113
        %v699 = vpop.permute.xlu0 %698
        %700 = vrot.lane.b32.xlu0 %v492, 113
        %v701 = vpop.permute.xlu0 %700
        %vm702 = vcmp.lt.s32.totalorder %v502, 113
        %v703 = vsel %vm702, %v699, %v701
        %v704 = vsel %vm702, %v697, %v699
        %v705 = vsel %vm702, %v695, %v697
        %v706 = vsel %vm702, %v701, %v695
        %s707 = scalar_lea.vmem %s7, 24
        %v708 = vld [vmem:[%s707] sm:$0xf]
        %v710 = vlaneseq
        %v711 = vshrl.u32 %v710, 7
        %v712 = vsub.s32 0, %v711
        %v713 = vrot.slane %v708, %v712
        %v714 = vlaneseq
        %v715 = vshrl.u32 %v714, 7
        %v716 = vsub.s32 1, %v715
        %v717 = vrot.slane %v708, %v716
        %v718 = vlaneseq
        %v719 = vshrl.u32 %v718, 7
        %v720 = vsub.s32 2, %v719
        %v721 = vrot.slane %v708, %v720
        %v722 = vlaneseq
        %v723 = vshrl.u32 %v722, 7
        %v724 = vsub.s32 3, %v723
        %v725 = vrot.slane %v708, %v724
        %v730 = vmul.f32 %v705, %v713
        %v731 = vmul.f32 %v704, %v717
        %v732 = vmul.f32 %v703, %v721
        %v733 = vmul.f32 %v706, %v725
        %734 = vrot.lane.b32.xlu0 %v489, 112
        %v735 = vpop.permute.xlu0 %734
        %736 = vrot.lane.b32.xlu0 %v490, 112
        %v737 = vpop.permute.xlu0 %736
        %738 = vrot.lane.b32.xlu0 %v491, 112
        %v739 = vpop.permute.xlu0 %738
        %740 = vrot.lane.b32.xlu0 %v492, 112
        %v741 = vpop.permute.xlu0 %740
        %vm742 = vcmp.lt.s32.totalorder %v502, 112
        %v743 = vsel %vm742, %v739, %v741
        %v744 = vsel %vm742, %v737, %v739
        %v745 = vsel %vm742, %v735, %v737
        %v746 = vsel %vm742, %v741, %v735
        %s747 = scalar_lea.vmem %s7, 28
        %v748 = vld [vmem:[%s747] sm:$0xf]
        %v750 = vlaneseq
        %v751 = vshrl.u32 %v750, 7
        %v752 = vsub.s32 0, %v751
        %v753 = vrot.slane %v748, %v752
        %v754 = vlaneseq
        %v755 = vshrl.u32 %v754, 7
        %v756 = vsub.s32 1, %v755
        %v757 = vrot.slane %v748, %v756
        %v758 = vlaneseq
        %v759 = vshrl.u32 %v758, 7
        %v760 = vsub.s32 2, %v759
        %v761 = vrot.slane %v748, %v760
        %v762 = vlaneseq
        %v763 = vshrl.u32 %v762, 7
        %v764 = vsub.s32 3, %v763
        %v765 = vrot.slane %v748, %v764
        %v770 = vmul.f32 %v745, %v753
        %v771 = vmul.f32 %v744, %v757
        %v772 = vmul.f32 %v743, %v761
        %v773 = vmul.f32 %v746, %v765
        %774 = vrot.lane.b32.xlu0 %v489, 111
        %v775 = vpop.permute.xlu0 %774
        %776 = vrot.lane.b32.xlu0 %v490, 111
        %v777 = vpop.permute.xlu0 %776
        %778 = vrot.lane.b32.xlu0 %v491, 111
        %v779 = vpop.permute.xlu0 %778
        %780 = vrot.lane.b32.xlu0 %v492, 111
        %v781 = vpop.permute.xlu0 %780
        %vm782 = vcmp.lt.s32.totalorder %v502, 111
        %v783 = vsel %vm782, %v779, %v781
        %v784 = vsel %vm782, %v777, %v779
        %v785 = vsel %vm782, %v775, %v777
        %v786 = vsel %vm782, %v781, %v775
        %s787 = scalar_lea.vmem %s7, 32
        %v788 = vld [vmem:[%s787] sm:$0xf]
        %v790 = vlaneseq
        %v791 = vshrl.u32 %v790, 7
        %v792 = vsub.s32 0, %v791
        %v793 = vrot.slane %v788, %v792
        %v794 = vlaneseq
        %v795 = vshrl.u32 %v794, 7
        %v796 = vsub.s32 1, %v795
        %v797 = vrot.slane %v788, %v796
        %v798 = vlaneseq
        %v799 = vshrl.u32 %v798, 7
        %v800 = vsub.s32 2, %v799
        %v801 = vrot.slane %v788, %v800
        %v802 = vlaneseq
        %v803 = vshrl.u32 %v802, 7
        %v804 = vsub.s32 3, %v803
        %v805 = vrot.slane %v788, %v804
        %v810 = vmul.f32 %v785, %v793
        %v811 = vmul.f32 %v784, %v797
        %v812 = vmul.f32 %v783, %v801
        %v813 = vmul.f32 %v786, %v805
        %v814 = vld [vmem:[%s3] sm:$0xff]
        %v815 = vld [vmem:[%s4] sm:$0xff]
        %817 = vset.pattern.permute.xlu0 0
        %818 = vperm.xlu0 %817, %v815
        %v819 = vpop.permute.xlu0 %818
        %vm821 = vcmask 588800
        %v823 = vsel %vm821, %v814, 0
        %825 = vmatprep.subr.mxu0 %v531
        %826 = vmatpush1.msra.mxu0 %v530
        %827 = vmatprep.subr.mxu0 %v571
        %828 = vmatpush1.msra.mxu0 %v570
        %829 = vmatprep.subr.mxu0 %v611
        %830 = vmatpush1.msra.mxu0 %v610
        %831 = vmatprep.subr.mxu0 %v651
        %832 = vmatpush1.msra.mxu0 %v650
        %833 = vmatprep.subr.mxu0 %v490
        %834 = vmatpush1.msra.mxu0 %v489
        %835 = vmatprep.subr.mxu0 %v691
        %836 = vmatpush1.msra.mxu0 %v690
        %837 = vmatprep.subr.mxu0 %v731
        %838 = vmatpush1.msra.mxu0 %v730
        %839 = vmatprep.subr.mxu0 %v771
        %840 = vmatpush1.msra.mxu0 %v770
        %841 = vmatprep.subr.mxu0 %v811
        %842 = vmatpush1.msra.mxu0 %v810
        %843 = vmatprep.subr.mxu0 0.0
        %844 = vmatpush1.msra.mxu0 0.0
        %845 = vmatprep.subr.mxu0 0.0
        %846 = vmatpush1.msra.mxu0 0.0
        %847 = vmatprep.subr.mxu0 0.0
        %848 = vmatpush1.msra.mxu0 0.0
        %849 = vmatprep.subr.mxu0 0.0
        %850 = vmatpush1.msra.mxu0 0.0
        %851 = vmatprep.subr.mxu0 0.0
        %852 = vmatpush1.msra.mxu0 0.0
        %853 = vmatprep.subr.mxu0 0.0
        %854 = vmatpush1.msra.mxu0 0.0
        %855 = vmatprep.subr.mxu0 0.0
        %856 = vmatpush1.msra.mxu0 0.0
        %857 = vmatprep.subr.mxu0 0.0
        %858 = vmatpush1.msra.mxu0 0.0
        %859 = vmatprep.subr.mxu0 0.0
        %860 = vmatpush1.msra.mxu0 0.0
        %861 = vmatprep.subr.mxu0 0.0
        %862 = vmatpush1.msra.mxu0 0.0
        %863 = vmatprep.subr.mxu0 0.0
        %864 = vmatpush1.msra.mxu0 0.0
        %865 = vmatprep.subr.mxu0 0.0
        %866 = vmatpush1.msra.mxu0 0.0
        %867 = vmatprep.subr.mxu0 0.0
        %868 = vmatpush1.msra.mxu0 0.0
        %869 = vmatprep.subr.mxu0 0.0
        %870 = vmatpush1.msra.mxu0 0.0
        %871 = vmatprep.subr.mxu0 0.0
        %872 = vmatpush1.msra.mxu0 0.0
        %873 = vmatprep.subr.mxu0 0.0
        %874 = vmatpush1.msra.mxu0 0.0
        %875 = vmatprep.subr.mxu0 0.0
        %876 = vmatpush1.msra.mxu0 0.0
        %877 = vmatprep.subr.mxu0 0.0
        %878 = vmatpush1.msra.mxu0 0.0
        %879 = vmatprep.subr.mxu0 0.0
        %880 = vmatpush1.msra.mxu0 0.0
        %881 = vmatprep.subr.mxu0 0.0
        %882 = vmatpush1.msra.mxu0 0.0
        %883 = vmatprep.subr.mxu0 0.0
        %884 = vmatpush1.msra.mxu0 0.0
        %885 = vmatprep.subr.mxu0 0.0
        %886 = vmatpush1.msra.mxu0 0.0
        %887 = vmatprep.subr.mxu0 0.0
        %888 = vmatpush1.msra.mxu0 0.0
        %889 = vmatprep.mubr.f32.mxu0 0.0
        %890 = vmatmul.mubr.f32.gmra.mrb[0].mxu0 %v823
        %v891 = vpop.f32.mrb[0].mxu0
        %v892 = vadd.f32 %v819, %v891
        %v893 = vpop.f32.mrb[0].mxu0
        %v894 = vadd.f32 %v819, %v893
        %895 = vdwg.mxu0
        %896 = vmatprep.subr.mxu0 %v533
        %897 = vmatpush1.msra.mxu0 %v532
        %898 = vmatprep.subr.mxu0 %v573
        %899 = vmatpush1.msra.mxu0 %v572
        %900 = vmatprep.subr.mxu0 %v613
        %901 = vmatpush1.msra.mxu0 %v612
        %902 = vmatprep.subr.mxu0 %v653
        %903 = vmatpush1.msra.mxu0 %v652
        %904 = vmatprep.subr.mxu0 %v492
        %905 = vmatpush1.msra.mxu0 %v491
        %906 = vmatprep.subr.mxu0 %v693
        %907 = vmatpush1.msra.mxu0 %v692
        %908 = vmatprep.subr.mxu0 %v733
        %909 = vmatpush1.msra.mxu0 %v732
        %910 = vmatprep.subr.mxu0 %v773
        %911 = vmatpush1.msra.mxu0 %v772
        %912 = vmatprep.subr.mxu0 %v813
        %913 = vmatpush1.msra.mxu0 %v812
        %914 = vmatprep.subr.mxu0 0.0
        %915 = vmatpush1.msra.mxu0 0.0
        %916 = vmatprep.subr.mxu0 0.0
        %917 = vmatpush1.msra.mxu0 0.0
        %918 = vmatprep.subr.mxu0 0.0
        %919 = vmatpush1.msra.mxu0 0.0
        %920 = vmatprep.subr.mxu0 0.0
        %921 = vmatpush1.msra.mxu0 0.0
        %922 = vmatprep.subr.mxu0 0.0
        %923 = vmatpush1.msra.mxu0 0.0
        %924 = vmatprep.subr.mxu0 0.0
        %925 = vmatpush1.msra.mxu0 0.0
        %926 = vmatprep.subr.mxu0 0.0
        %927 = vmatpush1.msra.mxu0 0.0
        %928 = vmatprep.subr.mxu0 0.0
        %929 = vmatpush1.msra.mxu0 0.0
        %930 = vmatprep.subr.mxu0 0.0
        %931 = vmatpush1.msra.mxu0 0.0
        %932 = vmatprep.subr.mxu0 0.0
        %933 = vmatpush1.msra.mxu0 0.0
        %934 = vmatprep.subr.mxu0 0.0
        %935 = vmatpush1.msra.mxu0 0.0
        %936 = vmatprep.subr.mxu0 0.0
        %937 = vmatpush1.msra.mxu0 0.0
        %938 = vmatprep.subr.mxu0 0.0
        %939 = vmatpush1.msra.mxu0 0.0
        %940 = vmatprep.subr.mxu0 0.0
        %941 = vmatpush1.msra.mxu0 0.0
        %942 = vmatprep.subr.mxu0 0.0
        %943 = vmatpush1.msra.mxu0 0.0
        %944 = vmatprep.subr.mxu0 0.0
        %945 = vmatpush1.msra.mxu0 0.0
        %946 = vmatprep.subr.mxu0 0.0
        %947 = vmatpush1.msra.mxu0 0.0
        %948 = vmatprep.subr.mxu0 0.0
        %949 = vmatpush1.msra.mxu0 0.0
        %950 = vmatprep.subr.mxu0 0.0
        %951 = vmatpush1.msra.mxu0 0.0
        %952 = vmatprep.subr.mxu0 0.0
        %953 = vmatpush1.msra.mxu0 0.0
        %954 = vmatprep.subr.mxu0 0.0
        %955 = vmatpush1.msra.mxu0 0.0
        %956 = vmatprep.subr.mxu0 0.0
        %957 = vmatpush1.msra.mxu0 0.0
        %958 = vmatprep.subr.mxu0 0.0
        %959 = vmatpush1.msra.mxu0 0.0
        %960 = vmatprep.mubr.f32.mxu0 0.0
        %961 = vmatmul.mubr.f32.gmra.mrb[0].mxu0 %v823
        %v962 = vpop.f32.mrb[0].mxu0
        %v963 = vadd.f32 %v819, %v962
        %v964 = vpop.f32.mrb[0].mxu0
        %v965 = vadd.f32 %v819, %v964
        %966 = vdwg.mxu0
        %v967 = vmax.f32 %v892, 0.0
        %v968 = vmax.f32 %v894, 0.0
        %v969 = vmax.f32 %v963, 0.0
        %v970 = vmax.f32 %v965, 0.0
        %v971 = vld [vmem:[%s5] sm:$0xff]
        %v972 = vld [vmem:[%s5 + $0x8] sm:$0xff]
        %v973 = vld [vmem:[%s6] sm:$0xff]
        %v974 = vld [vmem:[%s6 + $0x8] sm:$0xff]
        %976 = vset.pattern.permute.xlu0 0
        %977 = vperm.xlu0 %976, %v973
        %v978 = vpop.permute.xlu0 %977
        %981 = vset.pattern.permute.xlu0 0
        %982 = vperm.xlu0 %981, %v974
        %v983 = vpop.permute.xlu0 %982
        %vm985 = vcmask 64512
        %v987 = vsel %vm985, %v971, 0
        %v990 = vsel %vm985, %v972, 0
        %992 = vmatprep.subr.mxu0 %v968
        %993 = vmatpush1.msra.mxu0 %v967
        %994 = vmatprep.subr.mxu0 0.0
        %995 = vmatpush1.msra.mxu0 0.0
        %996 = vmatprep.subr.mxu0 0.0
        %997 = vmatpush1.msra.mxu0 0.0
        %998 = vmatprep.subr.mxu0 0.0
        %999 = vmatpush1.msra.mxu0 0.0
        %1000 = vmatprep.subr.mxu0 0.0
        %1001 = vmatpush1.msra.mxu0 0.0
        %1002 = vmatprep.subr.mxu0 0.0
        %1003 = vmatpush1.msra.mxu0 0.0
        %1004 = vmatprep.subr.mxu0 0.0
        %1005 = vmatpush1.msra.mxu0 0.0
        %1006 = vmatprep.subr.mxu0 0.0
        %1007 = vmatpush1.msra.mxu0 0.0
        %1008 = vmatprep.subr.mxu0 0.0
        %1009 = vmatpush1.msra.mxu0 0.0
        %1010 = vmatprep.subr.mxu0 0.0
        %1011 = vmatpush1.msra.mxu0 0.0
        %1012 = vmatprep.subr.mxu0 0.0
        %1013 = vmatpush1.msra.mxu0 0.0
        %1014 = vmatprep.subr.mxu0 0.0
        %1015 = vmatpush1.msra.mxu0 0.0
        %1016 = vmatprep.subr.mxu0 0.0
        %1017 = vmatpush1.msra.mxu0 0.0
        %1018 = vmatprep.subr.mxu0 0.0
        %1019 = vmatpush1.msra.mxu0 0.0
        %1020 = vmatprep.subr.mxu0 0.0
        %1021 = vmatpush1.msra.mxu0 0.0
        %1022 = vmatprep.subr.mxu0 0.0
        %1023 = vmatpush1.msra.mxu0 0.0
        %1024 = vmatprep.subr.mxu0 0.0
        %1025 = vmatpush1.msra.mxu0 0.0
        %1026 = vmatprep.subr.mxu0 0.0
        %1027 = vmatpush1.msra.mxu0 0.0
        %1028 = vmatprep.subr.mxu0 0.0
        %1029 = vmatpush1.msra.mxu0 0.0
        %1030 = vmatprep.subr.mxu0 0.0
        %1031 = vmatpush1.msra.mxu0 0.0
        %1032 = vmatprep.subr.mxu0 0.0
        %1033 = vmatpush1.msra.mxu0 0.0
        %1034 = vmatprep.subr.mxu0 0.0
        %1035 = vmatpush1.msra.mxu0 0.0
        %1036 = vmatprep.subr.mxu0 0.0
        %1037 = vmatpush1.msra.mxu0 0.0
        %1038 = vmatprep.subr.mxu0 0.0
        %1039 = vmatpush1.msra.mxu0 0.0
        %1040 = vmatprep.subr.mxu0 0.0
        %1041 = vmatpush1.msra.mxu0 0.0
        %1042 = vmatprep.subr.mxu0 0.0
        %1043 = vmatpush1.msra.mxu0 0.0
        %1044 = vmatprep.subr.mxu0 0.0
        %1045 = vmatpush1.msra.mxu0 0.0
        %1046 = vmatprep.subr.mxu0 0.0
        %1047 = vmatpush1.msra.mxu0 0.0
        %1048 = vmatprep.subr.mxu0 0.0
        %1049 = vmatpush1.msra.mxu0 0.0
        %1050 = vmatprep.subr.mxu0 0.0
        %1051 = vmatpush1.msra.mxu0 0.0
        %1052 = vmatprep.subr.mxu0 0.0
        %1053 = vmatpush1.msra.mxu0 0.0
        %1054 = vmatprep.subr.mxu0 0.0
        %1055 = vmatpush1.msra.mxu0 0.0
        %1056 = vmatprep.mubr.f32.mxu0 0.0
        %1057 = vmatmul.mubr.f32.gmra.mrb[0].mxu0 %v987
        %v1058 = vpop.f32.mrb[0].mxu0
        %v1059 = vadd.f32 %v978, %v1058
        %v1060 = vpop.f32.mrb[0].mxu0
        %v1061 = vadd.f32 %v978, %v1060
        %1062 = vmatprep.mubr.f32.mxu0 0.0
        %1063 = vmatmul.mubr.f32.gmra.mrb[0].mxu0 %v990
        %v1064 = vpop.f32.mrb[0].mxu0
        %v1065 = vadd.f32 %v983, %v1064
        %v1066 = vpop.f32.mrb[0].mxu0
        %v1067 = vadd.f32 %v983, %v1066
        %1068 = vdwg.mxu0
        %1069 = vmatprep.subr.mxu0 %v970
        %1070 = vmatpush1.msra.mxu0 %v969
        %1071 = vmatprep.subr.mxu0 0.0
        %1072 = vmatpush1.msra.mxu0 0.0
        %1073 = vmatprep.subr.mxu0 0.0
        %1074 = vmatpush1.msra.mxu0 0.0
        %1075 = vmatprep.subr.mxu0 0.0
        %1076 = vmatpush1.msra.mxu0 0.0
        %1077 = vmatprep.subr.mxu0 0.0
        %1078 = vmatpush1.msra.mxu0 0.0
        %1079 = vmatprep.subr.mxu0 0.0
        %1080 = vmatpush1.msra.mxu0 0.0
        %1081 = vmatprep.subr.mxu0 0.0
        %1082 = vmatpush1.msra.mxu0 0.0
        %1083 = vmatprep.subr.mxu0 0.0
        %1084 = vmatpush1.msra.mxu0 0.0
        %1085 = vmatprep.subr.mxu0 0.0
        %1086 = vmatpush1.msra.mxu0 0.0
        %1087 = vmatprep.subr.mxu0 0.0
        %1088 = vmatpush1.msra.mxu0 0.0
        %1089 = vmatprep.subr.mxu0 0.0
        %1090 = vmatpush1.msra.mxu0 0.0
        %1091 = vmatprep.subr.mxu0 0.0
        %1092 = vmatpush1.msra.mxu0 0.0
        %1093 = vmatprep.subr.mxu0 0.0
        %1094 = vmatpush1.msra.mxu0 0.0
        %1095 = vmatprep.subr.mxu0 0.0
        %1096 = vmatpush1.msra.mxu0 0.0
        %1097 = vmatprep.subr.mxu0 0.0
        %1098 = vmatpush1.msra.mxu0 0.0
        %1099 = vmatprep.subr.mxu0 0.0
        %1100 = vmatpush1.msra.mxu0 0.0
        %1101 = vmatprep.subr.mxu0 0.0
        %1102 = vmatpush1.msra.mxu0 0.0
        %1103 = vmatprep.subr.mxu0 0.0
        %1104 = vmatpush1.msra.mxu0 0.0
        %1105 = vmatprep.subr.mxu0 0.0
        %1106 = vmatpush1.msra.mxu0 0.0
        %1107 = vmatprep.subr.mxu0 0.0
        %1108 = vmatpush1.msra.mxu0 0.0
        %1109 = vmatprep.subr.mxu0 0.0
        %1110 = vmatpush1.msra.mxu0 0.0
        %1111 = vmatprep.subr.mxu0 0.0
        %1112 = vmatpush1.msra.mxu0 0.0
        %1113 = vmatprep.subr.mxu0 0.0
        %1114 = vmatpush1.msra.mxu0 0.0
        %1115 = vmatprep.subr.mxu0 0.0
        %1116 = vmatpush1.msra.mxu0 0.0
        %1117 = vmatprep.subr.mxu0 0.0
        %1118 = vmatpush1.msra.mxu0 0.0
        %1119 = vmatprep.subr.mxu0 0.0
        %1120 = vmatpush1.msra.mxu0 0.0
        %1121 = vmatprep.subr.mxu0 0.0
        %1122 = vmatpush1.msra.mxu0 0.0
        %1123 = vmatprep.subr.mxu0 0.0
        %1124 = vmatpush1.msra.mxu0 0.0
        %1125 = vmatprep.subr.mxu0 0.0
        %1126 = vmatpush1.msra.mxu0 0.0
        %1127 = vmatprep.subr.mxu0 0.0
        %1128 = vmatpush1.msra.mxu0 0.0
        %1129 = vmatprep.subr.mxu0 0.0
        %1130 = vmatpush1.msra.mxu0 0.0
        %1131 = vmatprep.subr.mxu0 0.0
        %1132 = vmatpush1.msra.mxu0 0.0
        %1133 = vmatprep.mubr.f32.mxu0 0.0
        %1134 = vmatmul.mubr.f32.gmra.mrb[0].mxu0 %v987
        %v1135 = vpop.f32.mrb[0].mxu0
        %v1136 = vadd.f32 %v978, %v1135
        %v1137 = vpop.f32.mrb[0].mxu0
        %v1138 = vadd.f32 %v978, %v1137
        %1139 = vmatprep.mubr.f32.mxu0 0.0
        %1140 = vmatmul.mubr.f32.gmra.mrb[0].mxu0 %v990
        %v1141 = vpop.f32.mrb[0].mxu0
        %v1142 = vadd.f32 %v983, %v1141
        %v1143 = vpop.f32.mrb[0].mxu0
        %v1144 = vadd.f32 %v983, %v1143
        %1145 = vdwg.mxu0
        %v1146 = vadd.f32 %v1059, %v327
        %v1147 = vadd.f32 %v1061, %v328
        %v1148 = vadd.f32 %v1136, %v332
        %v1149 = vadd.f32 %v1138, %v333
        %v1150 = vadd.f32 %v1065, %v329
        %v1151 = vadd.f32 %v1067, %v330
        %v1152 = vadd.f32 %v1142, %v334
        %v1153 = vadd.f32 %v1144, %v335
        %v1154 = vmax.f32 %v1146, 0.0
        %v1155 = vmax.f32 %v1147, 0.0
        %v1156 = vmax.f32 %v1148, 0.0
        %v1157 = vmax.f32 %v1149, 0.0
        %v1158 = vmax.f32 %v1150, 0.0
        %v1159 = vmax.f32 %v1151, 0.0
        %v1160 = vmax.f32 %v1152, 0.0
        %v1161 = vmax.f32 %v1153, 0.0
        %1162 = vst [vmem:[%s324] sm:$0xff] %v1154
        %1163 = vst [vmem:[%s324 + $0x8] sm:$0xff] %v1155
        %1164 = vst [vmem:[%s324 + $0x10] sm:$0xff] %v1158
        %1165 = vst [vmem:[%s324 + $0x18] sm:$0xff] %v1159
        %s1166 = scalar_lea.vmem %s324, 32 [#allocation5]
        %1167 = vst [vmem:[%s1166] sm:$0xff] %v1156
        %1168 = vst [vmem:[%s1166 + $0x8] sm:$0xff] %v1157
        %1169 = vst [vmem:[%s1166 + $0x10] sm:$0xff] %v1160
        %1170 = vst [vmem:[%s1166 + $0x18] sm:$0xff] %v1161
        %s1171 = sand.u32 %s206, 1
        %s1172 = scalar_lea.sflag [#allocation4], %s1171
        %s1173 = sand.u32 %s206, 1
        %s1174 = smul.addr %s1173, 64
        %s1175 = scalar_lea.vmem [#allocation5], %s1174
        // Predicated region
        $region57: #{tpu_custom_call.1} parent=51 // pred_check
          %p1176 = pneg %p216
        $region58: #{tpu_custom_call.1} parent=51 // pred_check_branch
          %1178 = sbr.rel (%p1176) target = $region60
        $region59: #{tpu_custom_call.1} parent=51 // pred_region
          %s1179 = smul.u32 2, %s25
          %s1181 = ssub.s32 1024, 1024
          %1182 = vsyncadd %s1172, %s1181
          %s1183 = smul.addr %s1179, 4
          %s1184 = smul.addr %s1183, 128
          %s1185 = scalar_lea.hbm %s8, %s1184
          %s1186 = sshll.u32 %s1175, 4
          %s1187 = int_to_ptr.vmem [resolvable:$true] %s1186
          %1192 = dma.vmem_to_hbm [thread:$0]  %s1187, 1024, %s1185, %s1172, 256, 256, 16
        $region60: #{tpu_custom_call.1} parent=51 // pred_fallthru
          _
      $region52: #{tpu_custom_call.1} parent=5 // pred_fallthru
        _
      %p1193 = scmp.le.s32.totalorder 2, %s20
      // Predicated region
      $region61: #{tpu_custom_call.1} parent=5 // pred_check
        %p1194 = pneg %p1193
      $region62: #{tpu_custom_call.1} parent=5 // pred_check_branch
        %1196 = sbr.rel (%p1194) target = $region64
      $region63: #{tpu_custom_call.1} parent=5 // pred_region
        %s1197 = ssub.s32 %s20, 2
        // Predicated region
        $region65: #{tpu_custom_call.1} parent=63 // pred_check
          %p1198 = pneg %p222
        $region66: #{tpu_custom_call.1} parent=63 // pred_check_branch
          %1200 = sbr.rel (%p1198) target = $region68
        $region67: #{tpu_custom_call.1} parent=63 // pred_region
          %s1201 = sand.u32 %s207, 1
          %s1202 = scalar_lea.sflag [#allocation4], %s1201
          %s1203 = sand.u32 %s207, 1
          %s1204 = smul.addr %s1203, 64
          %s1205 = scalar_lea.vmem [#allocation5], %s1204
          %1206 = dma.done %s1202, 1024
        $region68: #{tpu_custom_call.1} parent=63 // pred_fallthru
          _
      $region64: #{tpu_custom_call.1} parent=5 // pred_fallthru
        _
    $region6: #{tpu_custom_call.1} parent=1 // loop_footer
      %s24 = sadd.s32 1, %s20
    $region7: #{tpu_custom_call.1} parent=1 // loop_footer_branch
      %19 = sbr.rel target = $region3
    $region8: #{tpu_custom_call.1} parent=1 // loop_exit
      _
    %1207 = vsyncpa [#allocation3], 1
    %s1208 = scalar_lea.sflag [#allocation3], 1
    %1209 = vsyncpa %s1208, 1
    %1210 = vsyncpa [#allocation4], 1
    %s1211 = scalar_lea.sflag [#allocation4], 1
    %1212 = vsyncpa %s1211, 1

</llo_original>
